<compile_context>
chip_gen: v5e
topology: v5e:2x2
jax: 0.10.0
libtpu: 0.0.40
codegen_flags: <defaults>
</compile_context>

<pallas_src>
import functools

import jax
import jax.numpy as jnp
from jax.experimental import pallas as pl
from jax.experimental.pallas import tpu as pltpu

N_BITS = 8
N_LEVELS = float(2 ** N_BITS - 1)  # 255.0
LANE = 128
MIB = 1024 * 1024


def _round_up(x, m):
    return (x + m - 1) // m * m


def _asymm_quant(t, mini, maxi):
    """Fake-quantize t (ASYMMf, modo=0) given per-tensor extrema.

    torch reference:
        scale = 255 / (maxi - mini)
        q = round((t - mini) * scale) / scale + mini     (t if maxi == mini)

    Perf: the per-element `/ scale` is replaced by a multiply with the
    pre-computed scalar inverse (safe_denom / 255) -- one scalar divide
    instead of a per-vreg EUP reciprocal + VPU mul. May differ from torch by
    ~1 ulp near a rounding boundary.
    TODO(synk): end-to-end tolerance test vs the f32 torch reference.
    """
    denom = maxi - mini
    is_const = denom == 0.0
    safe_denom = jnp.where(is_const, 1.0, denom)
    scale = N_LEVELS / safe_denom        # scalar divide, once
    inv_scale = safe_denom / N_LEVELS    # scalar divide, once
    q = jnp.round((t - mini) * scale) * inv_scale + mini
    return jnp.where(is_const, t, q)


def _mxu_dot(h, w_ref, b_ref):
    """y = h @ W + b with bf16 MXU inputs, f32 accumulation.

    bf16 is the native MXU dtype on v5e/v6e/v7x; weights arrive in VMEM as
    bf16 (half the HBM DMA bytes). All element-wise math stays f32 (the v5e
    VPU/EUP have no bf16 support). Each activation `h` feeds exactly one dot,
    so the astype here is never duplicated.
    """
    return (
        jnp.dot(h.astype(jnp.bfloat16), w_ref[...],
                preferred_element_type=jnp.float32)
        + b_ref[...]
    )


def quantnet_kernel(*refs, output_width):
    """refs = (x, w0, b0, wh_1, bh_1, ..., w_out_pad, b_out_pad, out).

    The output linear's weight/bias arrive already zero-padded to the 128-lane
    output block; every per-tensor reduction after it is masked to the first
    `output_width` columns so semantics match the un-padded PyTorch reference,
    and the final out_ref store is a single unmasked lane-dense store.
    """
    x_ref = refs[0]
    out_ref = refs[-1]
    param_refs = refs[1:-1]

    h = x_ref[...]  # bf16; consumed directly by the first bf16 matmul

    # quantLinearStack blocks: Linear -> Quant -> ReLU -> Quant.
    # Intentionally an unrolled Python loop: each iteration touches different
    # refs and there are only a few iterations -- better for the LLO scheduler
    # than a dynamic fori_loop.
    n_stacks = (len(param_refs) - 2) // 2
    for i in range(n_stacks):
        h = _mxu_dot(h, param_refs[2 * i], param_refs[2 * i + 1])
        # First quant of the block: the only full XLU min/max pair it needs.
        mini = jnp.min(h)
        maxi = jnp.max(h)
        h = _asymm_quant(h, mini, maxi)
        h = jnp.maximum(h, 0.0)
        # Second quant reuses the first quant's extrema through the ReLU:
        # quant maps mini -> mini bit-exactly and maxi -> maxi to within ~1
        # ulp (it is a monotone map), and relu is monotone, so the post-ReLU
        # extrema are max(mini, 0) / max(maxi, 0). This removes 2 of the 4
        # cross-lane reductions per block from the serial critical path.
        # TODO(synk): tolerance-check the ~1 ulp maxi drift vs torch.
        h = _asymm_quant(h, jnp.maximum(mini, 0.0), jnp.maximum(maxi, 0.0))

    # Output linear (lane-padded to a 128-wide block; pad columns are exactly
    # 0 since the pad weights/bias are 0).
    h = _mxu_dot(h, param_refs[-2], param_refs[-1])

    # Mask of the real logit columns; all reductions below are restricted to
    # it so the pad columns never influence the real values.
    col = jax.lax.broadcasted_iota(jnp.int32, h.shape, 1)
    valid = col < output_width
    pinf = jnp.float32(jnp.inf)
    ninf = jnp.float32(-jnp.inf)

    # Quant of the logits (per-tensor extrema over valid columns only).
    mini = jnp.min(jnp.where(valid, h, pinf))
    maxi = jnp.max(jnp.where(valid, h, ninf))
    h = _asymm_quant(h, mini, maxi)

    # log_softmax over dim=1 (valid columns only, numerically stable).
    h_valid = jnp.where(valid, h, ninf)
    m = jnp.max(h_valid, axis=1, keepdims=True)
    s = jnp.sum(jnp.exp(h_valid - m), axis=1, keepdims=True)  # pads -> exp(-inf)=0
    lse = jnp.log(s) + m
    h = h - lse

    # Final quant (per-tensor extrema over valid columns only).
    mini2 = jnp.min(jnp.where(valid, h, pinf))
    maxi2 = jnp.max(jnp.where(valid, h, ninf))
    h = _asymm_quant(h, mini2, maxi2)

    # Single unmasked lane-dense store; pad columns written as 0 with a pure
    # VPU select -- no MXU push/pop on the tail of the critical path.
    out_ref[...] = jnp.where(valid, h, 0.0).astype(out_ref.dtype)


def init_params(key, n_layers, hidden_width, input_width, output_width):
    """Deterministic nn.Linear-style init: U(-1/sqrt(fan_in), 1/sqrt(fan_in)).

    Weights stored as (in_features, out_features); biases as (1, out_features).
    """
    params = []
    dims = [(input_width, hidden_width)]
    dims += [(hidden_width, hidden_width)] * n_layers
    dims += [(hidden_width, output_width)]
    for (fan_in, fan_out) in dims:
        key, kw, kb = jax.random.split(key, 3)
        bound = 1.0 / jnp.sqrt(jnp.float32(fan_in))
        w = jax.random.uniform(kw, (fan_in, fan_out), jnp.float32, -bound, bound)
        b = jax.random.uniform(kb, (1, fan_out), jnp.float32, -bound, bound)
        params.append((w, b))
    return params


def _padded_vmem_bytes(shape, itemsize):
    """Approximate VMEM footprint of a 2D array after (sublane, lane) padding."""
    rows = shape[0] if len(shape) >= 2 else 1
    cols = shape[-1]
    sublane = 8 * (4 // itemsize)  # f32 -> 8 rows, bf16 -> 16 rows
    return (_round_up(max(rows, 1), sublane)
            * _round_up(max(cols, 1), LANE) * itemsize)


@functools.partial(jax.jit, static_argnames=("output_width",))
def quantnet_forward(x_nchw, flat_params, output_width):
    batch = x_nchw.shape[0]
    # nn.Flatten (row-major), then bf16 for the MXU / DMA path. Quantization
    # and all element-wise math inside the kernel stay f32.
    # TODO(synk): validate end-to-end tolerance vs the f32 torch reference --
    # bf16 MXU inputs perturb the per-tensor min/max slightly (the K=1024
    # first layer is the sensitive one).
    x_flat = x_nchw.reshape(batch, -1).astype(jnp.bfloat16)

    out_padded = _round_up(output_width, LANE)

    # Lane-pad the output layer to a full 128-lane block in the wrapper
    # (plain XLA, outside the kernel). Zero weight columns + zero bias mean
    # the padded logits are exactly 0 and are masked out of every reduction
    # inside the kernel, so semantics are unchanged.
    params = list(flat_params)
    pad = out_padded - output_width
    params[-2] = jnp.pad(params[-2], ((0, 0), (0, pad)))
    params[-1] = jnp.pad(params[-1], ((0, 0), (0, pad)))

    # Weights in bf16 (native MXU dtype, half the HBM->VMEM bytes for the
    # dominant 1024x32 w0); biases stay f32 (added to the f32 accumulator).
    inputs = [x_flat]
    for i, p in enumerate(params):
        inputs.append(p.astype(jnp.bfloat16) if i % 2 == 0 else p)

    vmem_spec = pl.BlockSpec(memory_space=pltpu.MemorySpace.VMEM)

    # Advisory cost estimate so XLA can schedule surrounding ops around the
    # custom call.
    weights = params[0::2]
    flops = int(sum(2 * batch * w.shape[0] * w.shape[1] for w in weights))
    bytes_accessed = int(
        x_flat.size * 2
        + sum(p.size * (2 if i % 2 == 0 else 4) for i, p in enumerate(params))
        + batch * out_padded * 4
    )
    cost = pl.CostEstimate(
        flops=flops,
        transcendentals=int(batch * (output_width + 1)),  # exp + log of softmax
        bytes_accessed=bytes_accessed,
    )

    # VMEM limit derived from the actual (layout-padded) buffer footprint plus
    # headroom, instead of a blanket 32 MiB: leaves scoped VMEM for XLA
    # fusions around the call and stays well clear of v7x's 64 MiB physical
    # VMEM even when the batch is scaled up.
    footprint = _padded_vmem_bytes(x_flat.shape, 2)
    for i, p in enumerate(params):
        footprint += _padded_vmem_bytes(p.shape, 2 if i % 2 == 0 else 4)
    footprint += _padded_vmem_bytes((batch, out_padded), 4)
    vmem_limit = int(min(max(4 * MIB, 2 * footprint + 2 * MIB), 64 * MIB))

    # NOTE on operating point: each quant uses a *per-tensor* (whole-batch)
    # min/max, so the whole batch stays resident in one un-gridded call --
    # tiling the batch over a grid would change results vs. PyTorch. At B=2
    # the call is launch/DMA/latency bound (<1% MXU utilization); the intended
    # operating point is caller-side batching with B >= 128 rows on v5e and
    # >= 256 on v6e/v7x (multiples thereof) to amortize launch + weight DMA
    # and fill the MXU M dimension.
    # TODO(synk): once batch is scaled, pipeline the x HBM read against the
    # first matmul (chunk `x @ w0` over batch rows with pltpu.emit_pipeline,
    # or memory_space=pl.ANY + manual make_async_copy double-buffering); the
    # per-tensor quant only needs the complete (B, hidden) h afterwards.
    # TODO(synk): two-pass (min/max, then apply) tiled variant for batches
    # that exceed VMEM; size the batch tile against v7x's 64 MiB (not the
    # 128 MiB of v5e/v6e) and mark the apply-pass batch axis "parallel" so it
    # shards across v7x's 2 TensorCores (min/max pass needs "arbitrary" or an
    # explicit cross-TC combine).
    out = pl.pallas_call(
        functools.partial(quantnet_kernel, output_width=output_width),
        out_shape=jax.ShapeDtypeStruct((batch, out_padded), jnp.float32),
        in_specs=[vmem_spec] * len(inputs),
        out_specs=vmem_spec,
        cost_estimate=cost,
        compiler_params=pltpu.CompilerParams(
            vmem_limit_bytes=vmem_limit,
        ),
    )(*inputs)
    return out[:, :output_width]


if __name__ == "__main__":
    # Small shapes consistent with the module's forward:
    # x: (B, C, H, W) = (2, 4, 16, 16)  ->  input_width = 4*16*16 = 1024
    n_layers = 2
    hidden_width = 32
    output_width = 10
    batch, channels, height, width = 2, 4, 16, 16
    input_width = channels * height * width

    key = jax.random.PRNGKey(0)
    key, kx = jax.random.split(key)
    x = jax.random.normal(kx, (batch, channels, height, width), jnp.float32)

    params = init_params(key, n_layers, hidden_width, input_width, output_width)
    flat_params = tuple(p for wb in params for p in wb)

    out = quantnet_forward(x, flat_params, output_width)
    out = jax.block_until_ready(out)

    assert out.shape == (batch, output_width)
    assert bool(jnp.all(jnp.isfinite(out)))
    # log_softmax outputs should be <= 0 (up to one quantization quantum)
    assert bool(jnp.all(out <= 1e-2))

    print("KERNEL_OK")
</pallas_src>

<mosaic_0001>
module attributes {stable_mosaic.version = 11 : i64} {
  func.func @quantnet_kernel(%arg0: memref<2x1024xbf16, #tpu.memory_space<vmem>>, %arg1: memref<1024x32xbf16, #tpu.memory_space<vmem>>, %arg2: memref<1x32xf32, #tpu.memory_space<vmem>>, %arg3: memref<32x32xbf16, #tpu.memory_space<vmem>>, %arg4: memref<1x32xf32, #tpu.memory_space<vmem>>, %arg5: memref<32x32xbf16, #tpu.memory_space<vmem>>, %arg6: memref<1x32xf32, #tpu.memory_space<vmem>>, %arg7: memref<32x128xbf16, #tpu.memory_space<vmem>>, %arg8: memref<1x128xf32, #tpu.memory_space<vmem>>, %arg9: memref<2x128xf32, #tpu.memory_space<vmem>>) attributes {dimension_semantics = [], scalar_prefetch = 0 : i64, scratch_operands = 0 : i64, tpu.core_type = #tpu.core_type<tc>} {
    %c0 = arith.constant 0 : index
    %c0_0 = arith.constant 0 : index
    %0 = vector.load %arg0[%c0, %c0_0] : memref<2x1024xbf16, #tpu.memory_space<vmem>>, vector<2x1024xbf16>
    %c0_1 = arith.constant 0 : index
    %c0_2 = arith.constant 0 : index
    %1 = vector.load %arg1[%c0_1, %c0_2] : memref<1024x32xbf16, #tpu.memory_space<vmem>>, vector<1024x32xbf16>
    %cst = arith.constant dense<0.000000e+00> : vector<2x32xf32>
    %2 = tpu.matmul %0, %1, %cst {dimension_numbers = #tpu.dot_dimension_numbers<[1], [0], [0], [1], [0, 0, 1, 1], [], []>} : vector<2x1024xbf16>, vector<1024x32xbf16>, vector<2x32xf32> -> vector<2x32xf32>
    %c0_3 = arith.constant 0 : index
    %c0_4 = arith.constant 0 : index
    %3 = vector.load %arg2[%c0_3, %c0_4] : memref<1x32xf32, #tpu.memory_space<vmem>>, vector<1x32xf32>
    %4 = vector.broadcast %3 : vector<1x32xf32> to vector<2x32xf32>
    %5 = arith.addf %2, %4 : vector<2x32xf32>
    %6 = vector.shape_cast %5 : vector<2x32xf32> to vector<1x2x32xf32>
    %cst_5 = arith.constant dense<0x7F800000> : vector<1xf32>
    %7 = vector.multi_reduction <minimumf>, %6, %cst_5 [1, 2] : vector<1x2x32xf32> to vector<1xf32>
    %8 = vector.shape_cast %7 : vector<1xf32> to vector<1x1x1xf32>
    %9 = vector.extract %8[0, 0, 0] : f32 from vector<1x1x1xf32>
    %10 = vector.shape_cast %5 : vector<2x32xf32> to vector<1x2x32xf32>
    %cst_6 = arith.constant dense<0xFF800000> : vector<1xf32>
    %11 = vector.multi_reduction <maximumf>, %10, %cst_6 [1, 2] : vector<1x2x32xf32> to vector<1xf32>
    %12 = vector.shape_cast %11 : vector<1xf32> to vector<1x1x1xf32>
    %13 = vector.extract %12[0, 0, 0] : f32 from vector<1x1x1xf32>
    %14 = arith.subf %13, %9 : f32
    %cst_7 = arith.constant 0.000000e+00 : f32
    %15 = arith.cmpf oeq, %14, %cst_7 : f32
    %cst_8 = arith.constant 1.000000e+00 : f32
    %16 = arith.select %15, %cst_8, %14 : f32
    %cst_9 = arith.constant 2.550000e+02 : f32
    %17 = arith.divf %cst_9, %16 : f32
    %cst_10 = arith.constant 2.550000e+02 : f32
    %18 = arith.divf %16, %cst_10 : f32
    %19 = vector.broadcast %9 : f32 to vector<2x32xf32>
    %20 = arith.subf %5, %19 : vector<2x32xf32>
    %21 = vector.broadcast %17 : f32 to vector<2x32xf32>
    %22 = arith.mulf %20, %21 : vector<2x32xf32>
    %23 = math.roundeven %22 : vector<2x32xf32>
    %24 = vector.broadcast %18 : f32 to vector<2x32xf32>
    %25 = arith.mulf %23, %24 : vector<2x32xf32>
    %26 = vector.broadcast %9 : f32 to vector<2x32xf32>
    %27 = arith.addf %25, %26 : vector<2x32xf32>
    %28 = arith.select %15, %5, %27 : vector<2x32xf32>
    %cst_11 = arith.constant 0.000000e+00 : f32
    %29 = vector.broadcast %cst_11 : f32 to vector<2x32xf32>
    %30 = arith.maximumf %28, %29 : vector<2x32xf32>
    %cst_12 = arith.constant 0.000000e+00 : f32
    %31 = arith.maximumf %9, %cst_12 : f32
    %cst_13 = arith.constant 0.000000e+00 : f32
    %32 = arith.maximumf %13, %cst_13 : f32
    %33 = arith.subf %32, %31 : f32
    %cst_14 = arith.constant 0.000000e+00 : f32
    %34 = arith.cmpf oeq, %33, %cst_14 : f32
    %cst_15 = arith.constant 1.000000e+00 : f32
    %35 = arith.select %34, %cst_15, %33 : f32
    %cst_16 = arith.constant 2.550000e+02 : f32
    %36 = arith.divf %cst_16, %35 : f32
    %cst_17 = arith.constant 2.550000e+02 : f32
    %37 = arith.divf %35, %cst_17 : f32
    %38 = vector.broadcast %31 : f32 to vector<2x32xf32>
    %39 = arith.subf %30, %38 : vector<2x32xf32>
    %40 = vector.broadcast %36 : f32 to vector<2x32xf32>
    %41 = arith.mulf %39, %40 : vector<2x32xf32>
    %42 = math.roundeven %41 : vector<2x32xf32>
    %43 = vector.broadcast %37 : f32 to vector<2x32xf32>
    %44 = arith.mulf %42, %43 : vector<2x32xf32>
    %45 = vector.broadcast %31 : f32 to vector<2x32xf32>
    %46 = arith.addf %44, %45 : vector<2x32xf32>
    %47 = arith.select %34, %30, %46 : vector<2x32xf32>
    %48 = arith.truncf %47 : vector<2x32xf32> to vector<2x32xbf16>
    %c0_18 = arith.constant 0 : index
    %c0_19 = arith.constant 0 : index
    %49 = vector.load %arg3[%c0_18, %c0_19] : memref<32x32xbf16, #tpu.memory_space<vmem>>, vector<32x32xbf16>
    %cst_20 = arith.constant dense<0.000000e+00> : vector<2x32xf32>
    %50 = tpu.matmul %48, %49, %cst_20 {dimension_numbers = #tpu.dot_dimension_numbers<[1], [0], [0], [1], [0, 0, 1, 1], [], []>} : vector<2x32xbf16>, vector<32x32xbf16>, vector<2x32xf32> -> vector<2x32xf32>
    %c0_21 = arith.constant 0 : index
    %c0_22 = arith.constant 0 : index
    %51 = vector.load %arg4[%c0_21, %c0_22] : memref<1x32xf32, #tpu.memory_space<vmem>>, vector<1x32xf32>
    %52 = vector.broadcast %51 : vector<1x32xf32> to vector<2x32xf32>
    %53 = arith.addf %50, %52 : vector<2x32xf32>
    %54 = vector.shape_cast %53 : vector<2x32xf32> to vector<1x2x32xf32>
    %cst_23 = arith.constant dense<0x7F800000> : vector<1xf32>
    %55 = vector.multi_reduction <minimumf>, %54, %cst_23 [1, 2] : vector<1x2x32xf32> to vector<1xf32>
    %56 = vector.shape_cast %55 : vector<1xf32> to vector<1x1x1xf32>
    %57 = vector.extract %56[0, 0, 0] : f32 from vector<1x1x1xf32>
    %58 = vector.shape_cast %53 : vector<2x32xf32> to vector<1x2x32xf32>
    %cst_24 = arith.constant dense<0xFF800000> : vector<1xf32>
    %59 = vector.multi_reduction <maximumf>, %58, %cst_24 [1, 2] : vector<1x2x32xf32> to vector<1xf32>
    %60 = vector.shape_cast %59 : vector<1xf32> to vector<1x1x1xf32>
    %61 = vector.extract %60[0, 0, 0] : f32 from vector<1x1x1xf32>
    %62 = arith.subf %61, %57 : f32
    %cst_25 = arith.constant 0.000000e+00 : f32
    %63 = arith.cmpf oeq, %62, %cst_25 : f32
    %cst_26 = arith.constant 1.000000e+00 : f32
    %64 = arith.select %63, %cst_26, %62 : f32
    %cst_27 = arith.constant 2.550000e+02 : f32
    %65 = arith.divf %cst_27, %64 : f32
    %cst_28 = arith.constant 2.550000e+02 : f32
    %66 = arith.divf %64, %cst_28 : f32
    %67 = vector.broadcast %57 : f32 to vector<2x32xf32>
    %68 = arith.subf %53, %67 : vector<2x32xf32>
    %69 = vector.broadcast %65 : f32 to vector<2x32xf32>
    %70 = arith.mulf %68, %69 : vector<2x32xf32>
    %71 = math.roundeven %70 : vector<2x32xf32>
    %72 = vector.broadcast %66 : f32 to vector<2x32xf32>
    %73 = arith.mulf %71, %72 : vector<2x32xf32>
    %74 = vector.broadcast %57 : f32 to vector<2x32xf32>
    %75 = arith.addf %73, %74 : vector<2x32xf32>
    %76 = arith.select %63, %53, %75 : vector<2x32xf32>
    %cst_29 = arith.constant 0.000000e+00 : f32
    %77 = vector.broadcast %cst_29 : f32 to vector<2x32xf32>
    %78 = arith.maximumf %76, %77 : vector<2x32xf32>
    %cst_30 = arith.constant 0.000000e+00 : f32
    %79 = arith.maximumf %57, %cst_30 : f32
    %cst_31 = arith.constant 0.000000e+00 : f32
    %80 = arith.maximumf %61, %cst_31 : f32
    %81 = arith.subf %80, %79 : f32
    %cst_32 = arith.constant 0.000000e+00 : f32
    %82 = arith.cmpf oeq, %81, %cst_32 : f32
    %cst_33 = arith.constant 1.000000e+00 : f32
    %83 = arith.select %82, %cst_33, %81 : f32
    %cst_34 = arith.constant 2.550000e+02 : f32
    %84 = arith.divf %cst_34, %83 : f32
    %cst_35 = arith.constant 2.550000e+02 : f32
    %85 = arith.divf %83, %cst_35 : f32
    %86 = vector.broadcast %79 : f32 to vector<2x32xf32>
    %87 = arith.subf %78, %86 : vector<2x32xf32>
    %88 = vector.broadcast %84 : f32 to vector<2x32xf32>
    %89 = arith.mulf %87, %88 : vector<2x32xf32>
    %90 = math.roundeven %89 : vector<2x32xf32>
    %91 = vector.broadcast %85 : f32 to vector<2x32xf32>
    %92 = arith.mulf %90, %91 : vector<2x32xf32>
    %93 = vector.broadcast %79 : f32 to vector<2x32xf32>
    %94 = arith.addf %92, %93 : vector<2x32xf32>
    %95 = arith.select %82, %78, %94 : vector<2x32xf32>
    %96 = arith.truncf %95 : vector<2x32xf32> to vector<2x32xbf16>
    %c0_36 = arith.constant 0 : index
    %c0_37 = arith.constant 0 : index
    %97 = vector.load %arg5[%c0_36, %c0_37] : memref<32x32xbf16, #tpu.memory_space<vmem>>, vector<32x32xbf16>
    %cst_38 = arith.constant dense<0.000000e+00> : vector<2x32xf32>
    %98 = tpu.matmul %96, %97, %cst_38 {dimension_numbers = #tpu.dot_dimension_numbers<[1], [0], [0], [1], [0, 0, 1, 1], [], []>} : vector<2x32xbf16>, vector<32x32xbf16>, vector<2x32xf32> -> vector<2x32xf32>
    %c0_39 = arith.constant 0 : index
    %c0_40 = arith.constant 0 : index
    %99 = vector.load %arg6[%c0_39, %c0_40] : memref<1x32xf32, #tpu.memory_space<vmem>>, vector<1x32xf32>
    %100 = vector.broadcast %99 : vector<1x32xf32> to vector<2x32xf32>
    %101 = arith.addf %98, %100 : vector<2x32xf32>
    %102 = vector.shape_cast %101 : vector<2x32xf32> to vector<1x2x32xf32>
    %cst_41 = arith.constant dense<0x7F800000> : vector<1xf32>
    %103 = vector.multi_reduction <minimumf>, %102, %cst_41 [1, 2] : vector<1x2x32xf32> to vector<1xf32>
    %104 = vector.shape_cast %103 : vector<1xf32> to vector<1x1x1xf32>
    %105 = vector.extract %104[0, 0, 0] : f32 from vector<1x1x1xf32>
    %106 = vector.shape_cast %101 : vector<2x32xf32> to vector<1x2x32xf32>
    %cst_42 = arith.constant dense<0xFF800000> : vector<1xf32>
    %107 = vector.multi_reduction <maximumf>, %106, %cst_42 [1, 2] : vector<1x2x32xf32> to vector<1xf32>
    %108 = vector.shape_cast %107 : vector<1xf32> to vector<1x1x1xf32>
    %109 = vector.extract %108[0, 0, 0] : f32 from vector<1x1x1xf32>
    %110 = arith.subf %109, %105 : f32
    %cst_43 = arith.constant 0.000000e+00 : f32
    %111 = arith.cmpf oeq, %110, %cst_43 : f32
    %cst_44 = arith.constant 1.000000e+00 : f32
    %112 = arith.select %111, %cst_44, %110 : f32
    %cst_45 = arith.constant 2.550000e+02 : f32
    %113 = arith.divf %cst_45, %112 : f32
    %cst_46 = arith.constant 2.550000e+02 : f32
    %114 = arith.divf %112, %cst_46 : f32
    %115 = vector.broadcast %105 : f32 to vector<2x32xf32>
    %116 = arith.subf %101, %115 : vector<2x32xf32>
    %117 = vector.broadcast %113 : f32 to vector<2x32xf32>
    %118 = arith.mulf %116, %117 : vector<2x32xf32>
    %119 = math.roundeven %118 : vector<2x32xf32>
    %120 = vector.broadcast %114 : f32 to vector<2x32xf32>
    %121 = arith.mulf %119, %120 : vector<2x32xf32>
    %122 = vector.broadcast %105 : f32 to vector<2x32xf32>
    %123 = arith.addf %121, %122 : vector<2x32xf32>
    %124 = arith.select %111, %101, %123 : vector<2x32xf32>
    %cst_47 = arith.constant 0.000000e+00 : f32
    %125 = vector.broadcast %cst_47 : f32 to vector<2x32xf32>
    %126 = arith.maximumf %124, %125 : vector<2x32xf32>
    %cst_48 = arith.constant 0.000000e+00 : f32
    %127 = arith.maximumf %105, %cst_48 : f32
    %cst_49 = arith.constant 0.000000e+00 : f32
    %128 = arith.maximumf %109, %cst_49 : f32
    %129 = arith.subf %128, %127 : f32
    %cst_50 = arith.constant 0.000000e+00 : f32
    %130 = arith.cmpf oeq, %129, %cst_50 : f32
    %cst_51 = arith.constant 1.000000e+00 : f32
    %131 = arith.select %130, %cst_51, %129 : f32
    %cst_52 = arith.constant 2.550000e+02 : f32
    %132 = arith.divf %cst_52, %131 : f32
    %cst_53 = arith.constant 2.550000e+02 : f32
    %133 = arith.divf %131, %cst_53 : f32
    %134 = vector.broadcast %127 : f32 to vector<2x32xf32>
    %135 = arith.subf %126, %134 : vector<2x32xf32>
    %136 = vector.broadcast %132 : f32 to vector<2x32xf32>
    %137 = arith.mulf %135, %136 : vector<2x32xf32>
    %138 = math.roundeven %137 : vector<2x32xf32>
    %139 = vector.broadcast %133 : f32 to vector<2x32xf32>
    %140 = arith.mulf %138, %139 : vector<2x32xf32>
    %141 = vector.broadcast %127 : f32 to vector<2x32xf32>
    %142 = arith.addf %140, %141 : vector<2x32xf32>
    %143 = arith.select %130, %126, %142 : vector<2x32xf32>
    %144 = arith.truncf %143 : vector<2x32xf32> to vector<2x32xbf16>
    %c0_54 = arith.constant 0 : index
    %c0_55 = arith.constant 0 : index
    %145 = vector.load %arg7[%c0_54, %c0_55] : memref<32x128xbf16, #tpu.memory_space<vmem>>, vector<32x128xbf16>
    %cst_56 = arith.constant dense<0.000000e+00> : vector<2x128xf32>
    %146 = tpu.matmul %144, %145, %cst_56 {dimension_numbers = #tpu.dot_dimension_numbers<[1], [0], [0], [1], [0, 0, 1, 1], [], []>} : vector<2x32xbf16>, vector<32x128xbf16>, vector<2x128xf32> -> vector<2x128xf32>
    %c0_57 = arith.constant 0 : index
    %c0_58 = arith.constant 0 : index
    %147 = vector.load %arg8[%c0_57, %c0_58] : memref<1x128xf32, #tpu.memory_space<vmem>>, vector<1x128xf32>
    %148 = vector.broadcast %147 : vector<1x128xf32> to vector<2x128xf32>
    %149 = arith.addf %146, %148 : vector<2x128xf32>
    %150 = tpu.iota {dimensions = array<i32: 1>} : vector<2x128xi32>
    %c10_i32 = arith.constant 10 : i32
    %151 = vector.broadcast %c10_i32 : i32 to vector<2x128xi32>
    %152 = arith.cmpi slt, %150, %151 : vector<2x128xi32>
    %cst_59 = arith.constant 0x7F800000 : f32
    %153 = vector.broadcast %cst_59 : f32 to vector<2x128xf32>
    %154 = arith.select %152, %149, %153 : vector<2x128xi1>, vector<2x128xf32>
    %155 = vector.shape_cast %154 : vector<2x128xf32> to vector<1x2x128xf32>
    %cst_60 = arith.constant dense<0x7F800000> : vector<1xf32>
    %156 = vector.multi_reduction <minimumf>, %155, %cst_60 [1, 2] : vector<1x2x128xf32> to vector<1xf32>
    %157 = vector.shape_cast %156 : vector<1xf32> to vector<1x1x1xf32>
    %158 = vector.extract %157[0, 0, 0] : f32 from vector<1x1x1xf32>
    %cst_61 = arith.constant 0xFF800000 : f32
    %159 = vector.broadcast %cst_61 : f32 to vector<2x128xf32>
    %160 = arith.select %152, %149, %159 : vector<2x128xi1>, vector<2x128xf32>
    %161 = vector.shape_cast %160 : vector<2x128xf32> to vector<1x2x128xf32>
    %cst_62 = arith.constant dense<0xFF800000> : vector<1xf32>
    %162 = vector.multi_reduction <maximumf>, %161, %cst_62 [1, 2] : vector<1x2x128xf32> to vector<1xf32>
    %163 = vector.shape_cast %162 : vector<1xf32> to vector<1x1x1xf32>
    %164 = vector.extract %163[0, 0, 0] : f32 from vector<1x1x1xf32>
    %165 = arith.subf %164, %158 : f32
    %cst_63 = arith.constant 0.000000e+00 : f32
    %166 = arith.cmpf oeq, %165, %cst_63 : f32
    %cst_64 = arith.constant 1.000000e+00 : f32
    %167 = arith.select %166, %cst_64, %165 : f32
    %cst_65 = arith.constant 2.550000e+02 : f32
    %168 = arith.divf %cst_65, %167 : f32
    %cst_66 = arith.constant 2.550000e+02 : f32
    %169 = arith.divf %167, %cst_66 : f32
    %170 = vector.broadcast %158 : f32 to vector<2x128xf32>
    %171 = arith.subf %149, %170 : vector<2x128xf32>
    %172 = vector.broadcast %168 : f32 to vector<2x128xf32>
    %173 = arith.mulf %171, %172 : vector<2x128xf32>
    %174 = math.roundeven %173 : vector<2x128xf32>
    %175 = vector.broadcast %169 : f32 to vector<2x128xf32>
    %176 = arith.mulf %174, %175 : vector<2x128xf32>
    %177 = vector.broadcast %158 : f32 to vector<2x128xf32>
    %178 = arith.addf %176, %177 : vector<2x128xf32>
    %179 = arith.select %166, %149, %178 : vector<2x128xf32>
    %cst_67 = arith.constant 0xFF800000 : f32
    %180 = vector.broadcast %cst_67 : f32 to vector<2x128xf32>
    %181 = arith.select %152, %179, %180 : vector<2x128xi1>, vector<2x128xf32>
    %cst_68 = arith.constant dense<0xFF800000> : vector<2xf32>
    %182 = vector.multi_reduction <maximumf>, %181, %cst_68 [1] : vector<2x128xf32> to vector<2xf32>
    %183 = vector.shape_cast %182 : vector<2xf32> to vector<2x1xf32>
    %184 = vector.broadcast %183 : vector<2x1xf32> to vector<2x128xf32>
    %185 = arith.subf %181, %184 : vector<2x128xf32>
    %186 = math.exp %185 : vector<2x128xf32>
    %cst_69 = arith.constant dense<0.000000e+00> : vector<2xf32>
    %187 = vector.multi_reduction <add>, %186, %cst_69 [1] : vector<2x128xf32> to vector<2xf32>
    %188 = vector.shape_cast %187 : vector<2xf32> to vector<2x1xf32>
    %189 = math.log %188 : vector<2x1xf32>
    %190 = arith.addf %189, %183 : vector<2x1xf32>
    %191 = vector.broadcast %190 : vector<2x1xf32> to vector<2x128xf32>
    %192 = arith.subf %179, %191 : vector<2x128xf32>
    %cst_70 = arith.constant 0x7F800000 : f32
    %193 = vector.broadcast %cst_70 : f32 to vector<2x128xf32>
    %194 = arith.select %152, %192, %193 : vector<2x128xi1>, vector<2x128xf32>
    %195 = vector.shape_cast %194 : vector<2x128xf32> to vector<1x2x128xf32>
    %cst_71 = arith.constant dense<0x7F800000> : vector<1xf32>
    %196 = vector.multi_reduction <minimumf>, %195, %cst_71 [1, 2] : vector<1x2x128xf32> to vector<1xf32>
    %197 = vector.shape_cast %196 : vector<1xf32> to vector<1x1x1xf32>
    %198 = vector.extract %197[0, 0, 0] : f32 from vector<1x1x1xf32>
    %cst_72 = arith.constant 0xFF800000 : f32
    %199 = vector.broadcast %cst_72 : f32 to vector<2x128xf32>
    %200 = arith.select %152, %192, %199 : vector<2x128xi1>, vector<2x128xf32>
    %201 = vector.shape_cast %200 : vector<2x128xf32> to vector<1x2x128xf32>
    %cst_73 = arith.constant dense<0xFF800000> : vector<1xf32>
    %202 = vector.multi_reduction <maximumf>, %201, %cst_73 [1, 2] : vector<1x2x128xf32> to vector<1xf32>
    %203 = vector.shape_cast %202 : vector<1xf32> to vector<1x1x1xf32>
    %204 = vector.extract %203[0, 0, 0] : f32 from vector<1x1x1xf32>
    %205 = arith.subf %204, %198 : f32
    %cst_74 = arith.constant 0.000000e+00 : f32
    %206 = arith.cmpf oeq, %205, %cst_74 : f32
    %cst_75 = arith.constant 1.000000e+00 : f32
    %207 = arith.select %206, %cst_75, %205 : f32
    %cst_76 = arith.constant 2.550000e+02 : f32
    %208 = arith.divf %cst_76, %207 : f32
    %cst_77 = arith.constant 2.550000e+02 : f32
    %209 = arith.divf %207, %cst_77 : f32
    %210 = vector.broadcast %198 : f32 to vector<2x128xf32>
    %211 = arith.subf %192, %210 : vector<2x128xf32>
    %212 = vector.broadcast %208 : f32 to vector<2x128xf32>
    %213 = arith.mulf %211, %212 : vector<2x128xf32>
    %214 = math.roundeven %213 : vector<2x128xf32>
    %215 = vector.broadcast %209 : f32 to vector<2x128xf32>
    %216 = arith.mulf %214, %215 : vector<2x128xf32>
    %217 = vector.broadcast %198 : f32 to vector<2x128xf32>
    %218 = arith.addf %216, %217 : vector<2x128xf32>
    %219 = arith.select %206, %192, %218 : vector<2x128xf32>
    %cst_78 = arith.constant 0.000000e+00 : f32
    %220 = vector.broadcast %cst_78 : f32 to vector<2x128xf32>
    %221 = arith.select %152, %219, %220 : vector<2x128xi1>, vector<2x128xf32>
    %c0_79 = arith.constant 0 : index
    %c0_80 = arith.constant 0 : index
    %222 = vector.load %arg9[%c0_79, %c0_80] : memref<2x128xf32, #tpu.memory_space<vmem>>, vector<2x128xf32>
    tpu.vector_store %arg9[%c0_79, %c0_80], %221 {strides = array<i32>} : memref<2x128xf32, #tpu.memory_space<vmem>>, vector<2x128xf32>,
    return
  }
}

</mosaic_0001>

<llo_original>
// kernel: quantnet_forward.1
$region0: #{quantnet_forward.1}
  #allocation0 [shape = 'u32[]', space=smem, size = 0x4, offset = 0x4, fixed_abs, tag = 'smem constant byte address 0x4 - core index']
  #allocation1 [shape = 'u32[72,128]{1,0:T(1,128)}', space=vmem, size = 0x9000, scoped, tag = 'internal scratch']
  %s0 = inlined_call_operand.vmem [shape: bf16[2,1024], index: 0, kind: input, shape index: {}]
  %s1 = inlined_call_operand.vmem [shape: bf16[1024,32], index: 1, kind: input, shape index: {}]
  %s2 = inlined_call_operand.vmem [shape: f32[1,32], index: 2, kind: input, shape index: {}]
  %s3 = inlined_call_operand.vmem [shape: bf16[32,32], index: 3, kind: input, shape index: {}]
  %s4 = inlined_call_operand.vmem [shape: f32[1,32], index: 4, kind: input, shape index: {}]
  %s5 = inlined_call_operand.vmem [shape: bf16[32,32], index: 5, kind: input, shape index: {}]
  %s6 = inlined_call_operand.vmem [shape: f32[1,32], index: 6, kind: input, shape index: {}]
  %s7 = inlined_call_operand.vmem [shape: bf16[32,128], index: 7, kind: input, shape index: {}]
  %s8 = inlined_call_operand.vmem [shape: f32[1,128], index: 8, kind: input, shape index: {}]
  %s9 = inlined_call_operand.hbm [shape: f32[2,128], index: 9, kind: output, shape index: {}]
  %s10 = sld [smem:[#allocation0]]
  $region46: #{quantnet_forward.1} parent=0
    _
  %s12 = ssub.s32 1, %s10
  %s13 = scalar_select 0, %s12, %s10
  $region1: #{quantnet_forward.1} parent=0
    #allocation2 [shape = 'u8[1024]{0}', space=vmem, size = 0x400, scoped, tag = 'output window, operand 0, single buffered']
    #allocation3 [shape = 's32[1]{0}', space=sflag, size = 0x4, scoped, tag = 'scoped memory for quantnet_forward.1']
    %14 = vsyncpa [#allocation3], 0
    // Predicated region
    $region2: #{quantnet_forward.1} parent=1 // pred_check
      _
    $region3: #{quantnet_forward.1} parent=1 // pred_check_branch
      %16 = sbr.rel (0) target = $region5
    $region4: #{quantnet_forward.1} parent=1 // pred_region
      _
    $region5: #{quantnet_forward.1} parent=1 // pred_fallthru
      _
    // Predicated region
    $region6: #{quantnet_forward.1} parent=1 // pred_check
      _
    $region7: #{quantnet_forward.1} parent=1 // pred_check_branch
      %18 = sbr.rel (0) target = $region9
    $region8: #{quantnet_forward.1} parent=1 // pred_region
      _
    $region9: #{quantnet_forward.1} parent=1 // pred_fallthru
      _
    // Predicated region
    $region10: #{quantnet_forward.1} parent=1 // pred_check
      _
    $region11: #{quantnet_forward.1} parent=1 // pred_check_branch
      %20 = sbr.rel (0) target = $region13
    $region12: #{quantnet_forward.1} parent=1 // pred_region
      _
    $region13: #{quantnet_forward.1} parent=1 // pred_fallthru
      _
    // Predicated region
    $region14: #{quantnet_forward.1} parent=1 // pred_check
      _
    $region15: #{quantnet_forward.1} parent=1 // pred_check_branch
      %22 = sbr.rel (0) target = $region17
    $region16: #{quantnet_forward.1} parent=1 // pred_region
      _
    $region17: #{quantnet_forward.1} parent=1 // pred_fallthru
      _
    // Predicated region
    $region18: #{quantnet_forward.1} parent=1 // pred_check
      _
    $region19: #{quantnet_forward.1} parent=1 // pred_check_branch
      %24 = sbr.rel (0) target = $region21
    $region20: #{quantnet_forward.1} parent=1 // pred_region
      _
    $region21: #{quantnet_forward.1} parent=1 // pred_fallthru
      _
    // Predicated region
    $region22: #{quantnet_forward.1} parent=1 // pred_check
      _
    $region23: #{quantnet_forward.1} parent=1 // pred_check_branch
      %26 = sbr.rel (0) target = $region25
    $region24: #{quantnet_forward.1} parent=1 // pred_region
      _
    $region25: #{quantnet_forward.1} parent=1 // pred_fallthru
      _
    // Predicated region
    $region26: #{quantnet_forward.1} parent=1 // pred_check
      _
    $region27: #{quantnet_forward.1} parent=1 // pred_check_branch
      %28 = sbr.rel (0) target = $region29
    $region28: #{quantnet_forward.1} parent=1 // pred_region
      _
    $region29: #{quantnet_forward.1} parent=1 // pred_fallthru
      _
    // Predicated region
    $region30: #{quantnet_forward.1} parent=1 // pred_check
      _
    $region31: #{quantnet_forward.1} parent=1 // pred_check_branch
      %30 = sbr.rel (0) target = $region33
    $region32: #{quantnet_forward.1} parent=1 // pred_region
      _
    $region33: #{quantnet_forward.1} parent=1 // pred_fallthru
      _
    // Predicated region
    $region34: #{quantnet_forward.1} parent=1 // pred_check
      _
    $region35: #{quantnet_forward.1} parent=1 // pred_check_branch
      %32 = sbr.rel (0) target = $region37
    $region36: #{quantnet_forward.1} parent=1 // pred_region
      _
    $region37: #{quantnet_forward.1} parent=1 // pred_fallthru
      _
    %v34 = vld [vmem:[%s0] sm:$0xff]
    %v35 = vld [vmem:[%s1] sm:$0xf]
    %v36 = vld [vmem:[%s1 + $0x4] sm:$0xf]
    %v37 = vld [vmem:[%s1 + $0x8] sm:$0xf]
    %v38 = vld [vmem:[%s1 + $0xc] sm:$0xf]
    %v39 = vld [vmem:[%s1 + $0x10] sm:$0xf]
    %v40 = vld [vmem:[%s1 + $0x14] sm:$0xf]
    %v41 = vld [vmem:[%s1 + $0x18] sm:$0xf]
    %v42 = vld [vmem:[%s1 + $0x1c] sm:$0xf]
    %v43 = vld [vmem:[%s1 + $0x20] sm:$0xf]
    %v44 = vld [vmem:[%s1 + $0x24] sm:$0xf]
    %v45 = vld [vmem:[%s1 + $0x28] sm:$0xf]
    %v46 = vld [vmem:[%s1 + $0x2c] sm:$0xf]
    %v47 = vld [vmem:[%s1 + $0x30] sm:$0xf]
    %v48 = vld [vmem:[%s1 + $0x34] sm:$0xf]
    %v49 = vld [vmem:[%s1 + $0x38] sm:$0xf]
    %v50 = vld [vmem:[%s1 + $0x3c] sm:$0xf]
    %v51 = vld [vmem:[%s1 + $0x40] sm:$0xf]
    %v52 = vld [vmem:[%s1 + $0x44] sm:$0xf]
    %v53 = vld [vmem:[%s1 + $0x48] sm:$0xf]
    %v54 = vld [vmem:[%s1 + $0x4c] sm:$0xf]
    %v55 = vld [vmem:[%s1 + $0x50] sm:$0xf]
    %v56 = vld [vmem:[%s1 + $0x54] sm:$0xf]
    %v57 = vld [vmem:[%s1 + $0x58] sm:$0xf]
    %v58 = vld [vmem:[%s1 + $0x5c] sm:$0xf]
    %v59 = vld [vmem:[%s1 + $0x60] sm:$0xf]
    %v60 = vld [vmem:[%s1 + $0x64] sm:$0xf]
    %v61 = vld [vmem:[%s1 + $0x68] sm:$0xf]
    %v62 = vld [vmem:[%s1 + $0x6c] sm:$0xf]
    %v63 = vld [vmem:[%s1 + $0x70] sm:$0xf]
    %v64 = vld [vmem:[%s1 + $0x74] sm:$0xf]
    %v65 = vld [vmem:[%s1 + $0x78] sm:$0xf]
    %v66 = vld [vmem:[%s1 + $0x7c] sm:$0xf]
    %v67 = vld [vmem:[%s1 + $0x80] sm:$0xf]
    %v68 = vld [vmem:[%s1 + $0x84] sm:$0xf]
    %v69 = vld [vmem:[%s1 + $0x88] sm:$0xf]
    %v70 = vld [vmem:[%s1 + $0x8c] sm:$0xf]
    %v71 = vld [vmem:[%s1 + $0x90] sm:$0xf]
    %v72 = vld [vmem:[%s1 + $0x94] sm:$0xf]
    %v73 = vld [vmem:[%s1 + $0x98] sm:$0xf]
    %v74 = vld [vmem:[%s1 + $0x9c] sm:$0xf]
    %v75 = vld [vmem:[%s1 + $0xa0] sm:$0xf]
    %v76 = vld [vmem:[%s1 + $0xa4] sm:$0xf]
    %v77 = vld [vmem:[%s1 + $0xa8] sm:$0xf]
    %v78 = vld [vmem:[%s1 + $0xac] sm:$0xf]
    %v79 = vld [vmem:[%s1 + $0xb0] sm:$0xf]
    %v80 = vld [vmem:[%s1 + $0xb4] sm:$0xf]
    %v81 = vld [vmem:[%s1 + $0xb8] sm:$0xf]
    %v82 = vld [vmem:[%s1 + $0xbc] sm:$0xf]
    %v83 = vld [vmem:[%s1 + $0xc0] sm:$0xf]
    %v84 = vld [vmem:[%s1 + $0xc4] sm:$0xf]
    %v85 = vld [vmem:[%s1 + $0xc8] sm:$0xf]
    %v86 = vld [vmem:[%s1 + $0xcc] sm:$0xf]
    %v87 = vld [vmem:[%s1 + $0xd0] sm:$0xf]
    %v88 = vld [vmem:[%s1 + $0xd4] sm:$0xf]
    %v89 = vld [vmem:[%s1 + $0xd8] sm:$0xf]
    %v90 = vld [vmem:[%s1 + $0xdc] sm:$0xf]
    %v91 = vld [vmem:[%s1 + $0xe0] sm:$0xf]
    %v92 = vld [vmem:[%s1 + $0xe4] sm:$0xf]
    %v93 = vld [vmem:[%s1 + $0xe8] sm:$0xf]
    %v94 = vld [vmem:[%s1 + $0xec] sm:$0xf]
    %v95 = vld [vmem:[%s1 + $0xf0] sm:$0xf]
    %v96 = vld [vmem:[%s1 + $0xf4] sm:$0xf]
    %v97 = vld [vmem:[%s1 + $0xf8] sm:$0xf]
    %v98 = vld [vmem:[%s1 + $0xfc] sm:$0xf]
    %v99 = vld [vmem:[%s1 + $0x100] sm:$0xf]
    %v100 = vld [vmem:[%s1 + $0x104] sm:$0xf]
    %v101 = vld [vmem:[%s1 + $0x108] sm:$0xf]
    %v102 = vld [vmem:[%s1 + $0x10c] sm:$0xf]
    %v103 = vld [vmem:[%s1 + $0x110] sm:$0xf]
    %v104 = vld [vmem:[%s1 + $0x114] sm:$0xf]
    %v105 = vld [vmem:[%s1 + $0x118] sm:$0xf]
    %v106 = vld [vmem:[%s1 + $0x11c] sm:$0xf]
    %v107 = vld [vmem:[%s1 + $0x120] sm:$0xf]
    %v108 = vld [vmem:[%s1 + $0x124] sm:$0xf]
    %v109 = vld [vmem:[%s1 + $0x128] sm:$0xf]
    %v110 = vld [vmem:[%s1 + $0x12c] sm:$0xf]
    %v111 = vld [vmem:[%s1 + $0x130] sm:$0xf]
    %v112 = vld [vmem:[%s1 + $0x134] sm:$0xf]
    %v113 = vld [vmem:[%s1 + $0x138] sm:$0xf]
    %v114 = vld [vmem:[%s1 + $0x13c] sm:$0xf]
    %v115 = vld [vmem:[%s1 + $0x140] sm:$0xf]
    %v116 = vld [vmem:[%s1 + $0x144] sm:$0xf]
    %v117 = vld [vmem:[%s1 + $0x148] sm:$0xf]
    %v118 = vld [vmem:[%s1 + $0x14c] sm:$0xf]
    %v119 = vld [vmem:[%s1 + $0x150] sm:$0xf]
    %v120 = vld [vmem:[%s1 + $0x154] sm:$0xf]
    %v121 = vld [vmem:[%s1 + $0x158] sm:$0xf]
    %v122 = vld [vmem:[%s1 + $0x15c] sm:$0xf]
    %v123 = vld [vmem:[%s1 + $0x160] sm:$0xf]
    %v124 = vld [vmem:[%s1 + $0x164] sm:$0xf]
    %v125 = vld [vmem:[%s1 + $0x168] sm:$0xf]
    %v126 = vld [vmem:[%s1 + $0x16c] sm:$0xf]
    %v127 = vld [vmem:[%s1 + $0x170] sm:$0xf]
    %v128 = vld [vmem:[%s1 + $0x174] sm:$0xf]
    %v129 = vld [vmem:[%s1 + $0x178] sm:$0xf]
    %v130 = vld [vmem:[%s1 + $0x17c] sm:$0xf]
    %v131 = vld [vmem:[%s1 + $0x180] sm:$0xf]
    %v132 = vld [vmem:[%s1 + $0x184] sm:$0xf]
    %v133 = vld [vmem:[%s1 + $0x188] sm:$0xf]
    %v134 = vld [vmem:[%s1 + $0x18c] sm:$0xf]
    %v135 = vld [vmem:[%s1 + $0x190] sm:$0xf]
    %v136 = vld [vmem:[%s1 + $0x194] sm:$0xf]
    %v137 = vld [vmem:[%s1 + $0x198] sm:$0xf]
    %v138 = vld [vmem:[%s1 + $0x19c] sm:$0xf]
    %v139 = vld [vmem:[%s1 + $0x1a0] sm:$0xf]
    %v140 = vld [vmem:[%s1 + $0x1a4] sm:$0xf]
    %v141 = vld [vmem:[%s1 + $0x1a8] sm:$0xf]
    %v142 = vld [vmem:[%s1 + $0x1ac] sm:$0xf]
    %v143 = vld [vmem:[%s1 + $0x1b0] sm:$0xf]
    %v144 = vld [vmem:[%s1 + $0x1b4] sm:$0xf]
    %v145 = vld [vmem:[%s1 + $0x1b8] sm:$0xf]
    %v146 = vld [vmem:[%s1 + $0x1bc] sm:$0xf]
    %v147 = vld [vmem:[%s1 + $0x1c0] sm:$0xf]
    %v148 = vld [vmem:[%s1 + $0x1c4] sm:$0xf]
    %v149 = vld [vmem:[%s1 + $0x1c8] sm:$0xf]
    %v150 = vld [vmem:[%s1 + $0x1cc] sm:$0xf]
    %v151 = vld [vmem:[%s1 + $0x1d0] sm:$0xf]
    %v152 = vld [vmem:[%s1 + $0x1d4] sm:$0xf]
    %v153 = vld [vmem:[%s1 + $0x1d8] sm:$0xf]
    %v154 = vld [vmem:[%s1 + $0x1dc] sm:$0xf]
    %v155 = vld [vmem:[%s1 + $0x1e0] sm:$0xf]
    %v156 = vld [vmem:[%s1 + $0x1e4] sm:$0xf]
    %v157 = vld [vmem:[%s1 + $0x1e8] sm:$0xf]
    %v158 = vld [vmem:[%s1 + $0x1ec] sm:$0xf]
    %v159 = vld [vmem:[%s1 + $0x1f0] sm:$0xf]
    %v160 = vld [vmem:[%s1 + $0x1f4] sm:$0xf]
    %v161 = vld [vmem:[%s1 + $0x1f8] sm:$0xf]
    %v162 = vld [vmem:[%s1 + $0x1fc] sm:$0xf]
    %v163 = vld [vmem:[%s2] sm:$0x1]
    %v165 = vperm.slane %v163, 0
    %168 = vst [vmem:[#allocation1] ss:$9 sm:$0xff] %v34
    %v169 = vld [vmem:[#allocation1] sm:$0xff]
    %v170 = vld [vmem:[#allocation1 + $0x9] sm:$0xff]
    %v171 = vld [vmem:[#allocation1 + $0x12] sm:$0xff]
    %v172 = vld [vmem:[#allocation1 + $0x1b] sm:$0xff]
    %v173 = vld [vmem:[#allocation1 + $0x24] sm:$0xff]
    %v174 = vld [vmem:[#allocation1 + $0x2d] sm:$0xff]
    %v175 = vld [vmem:[#allocation1 + $0x36] sm:$0xff]
    %v176 = vld [vmem:[#allocation1 + $0x3f] sm:$0xff]
    %v313 = vunpack.c.l.b16 %v35
    %v314 = vunpack.c.l.b16 %v36
    %v315 = vunpack.c.l.b16 %v37
    %v316 = vunpack.c.l.b16 %v38
    %v317 = vunpack.c.l.b16 %v39
    %v318 = vunpack.c.l.b16 %v40
    %v319 = vunpack.c.l.b16 %v41
    %v320 = vunpack.c.l.b16 %v42
    %v321 = vunpack.c.l.b16 %v43
    %v322 = vunpack.c.l.b16 %v44
    %v323 = vunpack.c.l.b16 %v45
    %v324 = vunpack.c.l.b16 %v46
    %v325 = vunpack.c.l.b16 %v47
    %v326 = vunpack.c.l.b16 %v48
    %v327 = vunpack.c.l.b16 %v49
    %v328 = vunpack.c.l.b16 %v50
    %v329 = vunpack.c.l.b16 %v51
    %v330 = vunpack.c.l.b16 %v52
    %v331 = vunpack.c.l.b16 %v53
    %v332 = vunpack.c.l.b16 %v54
    %v333 = vunpack.c.l.b16 %v55
    %v334 = vunpack.c.l.b16 %v56
    %v335 = vunpack.c.l.b16 %v57
    %v336 = vunpack.c.l.b16 %v58
    %v337 = vunpack.c.l.b16 %v59
    %v338 = vunpack.c.l.b16 %v60
    %v339 = vunpack.c.l.b16 %v61
    %v340 = vunpack.c.l.b16 %v62
    %v341 = vunpack.c.l.b16 %v63
    %v342 = vunpack.c.l.b16 %v64
    %v343 = vunpack.c.l.b16 %v65
    %v344 = vunpack.c.l.b16 %v66
    %v345 = vunpack.c.l.b16 %v67
    %v346 = vunpack.c.l.b16 %v68
    %v347 = vunpack.c.l.b16 %v69
    %v348 = vunpack.c.l.b16 %v70
    %v349 = vunpack.c.l.b16 %v71
    %v350 = vunpack.c.l.b16 %v72
    %v351 = vunpack.c.l.b16 %v73
    %v352 = vunpack.c.l.b16 %v74
    %v353 = vunpack.c.l.b16 %v75
    %v354 = vunpack.c.l.b16 %v76
    %v355 = vunpack.c.l.b16 %v77
    %v356 = vunpack.c.l.b16 %v78
    %v357 = vunpack.c.l.b16 %v79
    %v358 = vunpack.c.l.b16 %v80
    %v359 = vunpack.c.l.b16 %v81
    %v360 = vunpack.c.l.b16 %v82
    %v361 = vunpack.c.l.b16 %v83
    %v362 = vunpack.c.l.b16 %v84
    %v363 = vunpack.c.l.b16 %v85
    %v364 = vunpack.c.l.b16 %v86
    %v365 = vunpack.c.l.b16 %v87
    %v366 = vunpack.c.l.b16 %v88
    %v367 = vunpack.c.l.b16 %v89
    %v368 = vunpack.c.l.b16 %v90
    %v369 = vunpack.c.l.b16 %v91
    %v370 = vunpack.c.l.b16 %v92
    %v371 = vunpack.c.l.b16 %v93
    %v372 = vunpack.c.l.b16 %v94
    %v373 = vunpack.c.l.b16 %v95
    %v374 = vunpack.c.l.b16 %v96
    %v375 = vunpack.c.l.b16 %v97
    %v376 = vunpack.c.l.b16 %v98
    %v377 = vunpack.c.l.b16 %v99
    %v378 = vunpack.c.l.b16 %v100
    %v379 = vunpack.c.l.b16 %v101
    %v380 = vunpack.c.l.b16 %v102
    %v381 = vunpack.c.l.b16 %v103
    %v382 = vunpack.c.l.b16 %v104
    %v383 = vunpack.c.l.b16 %v105
    %v384 = vunpack.c.l.b16 %v106
    %v385 = vunpack.c.l.b16 %v107
    %v386 = vunpack.c.l.b16 %v108
    %v387 = vunpack.c.l.b16 %v109
    %v388 = vunpack.c.l.b16 %v110
    %v389 = vunpack.c.l.b16 %v111
    %v390 = vunpack.c.l.b16 %v112
    %v391 = vunpack.c.l.b16 %v113
    %v392 = vunpack.c.l.b16 %v114
    %v393 = vunpack.c.l.b16 %v115
    %v394 = vunpack.c.l.b16 %v116
    %v395 = vunpack.c.l.b16 %v117
    %v396 = vunpack.c.l.b16 %v118
    %v397 = vunpack.c.l.b16 %v119
    %v398 = vunpack.c.l.b16 %v120
    %v399 = vunpack.c.l.b16 %v121
    %v400 = vunpack.c.l.b16 %v122
    %v401 = vunpack.c.l.b16 %v123
    %v402 = vunpack.c.l.b16 %v124
    %v403 = vunpack.c.l.b16 %v125
    %v404 = vunpack.c.l.b16 %v126
    %v405 = vunpack.c.l.b16 %v127
    %v406 = vunpack.c.l.b16 %v128
    %v407 = vunpack.c.l.b16 %v129
    %v408 = vunpack.c.l.b16 %v130
    %v409 = vunpack.c.l.b16 %v131
    %v410 = vunpack.c.l.b16 %v132
    %v411 = vunpack.c.l.b16 %v133
    %v412 = vunpack.c.l.b16 %v134
    %v413 = vunpack.c.l.b16 %v135
    %v414 = vunpack.c.l.b16 %v136
    %v415 = vunpack.c.l.b16 %v137
    %v416 = vunpack.c.l.b16 %v138
    %v417 = vunpack.c.l.b16 %v139
    %v418 = vunpack.c.l.b16 %v140
    %v419 = vunpack.c.l.b16 %v141
    %v420 = vunpack.c.l.b16 %v142
    %v421 = vunpack.c.l.b16 %v143
    %v422 = vunpack.c.l.b16 %v144
    %v423 = vunpack.c.l.b16 %v145
    %v424 = vunpack.c.l.b16 %v146
    %v425 = vunpack.c.l.b16 %v147
    %v426 = vunpack.c.l.b16 %v148
    %v427 = vunpack.c.l.b16 %v149
    %v428 = vunpack.c.l.b16 %v150
    %v429 = vunpack.c.l.b16 %v151
    %v430 = vunpack.c.l.b16 %v152
    %v431 = vunpack.c.l.b16 %v153
    %v432 = vunpack.c.l.b16 %v154
    %v433 = vunpack.c.l.b16 %v155
    %v434 = vunpack.c.l.b16 %v156
    %v435 = vunpack.c.l.b16 %v157
    %v436 = vunpack.c.l.b16 %v158
    %v437 = vunpack.c.l.b16 %v159
    %v438 = vunpack.c.l.b16 %v160
    %v439 = vunpack.c.l.b16 %v161
    %v440 = vunpack.c.l.b16 %v162
    %v441 = vpack.c.b16 %v314, %v313
    %v442 = vpack.c.b16 %v316, %v315
    %v443 = vpack.c.b16 %v318, %v317
    %v444 = vpack.c.b16 %v320, %v319
    %v445 = vpack.c.b16 %v322, %v321
    %v446 = vpack.c.b16 %v324, %v323
    %v447 = vpack.c.b16 %v326, %v325
    %v448 = vpack.c.b16 %v328, %v327
    %v449 = vpack.c.b16 %v330, %v329
    %v450 = vpack.c.b16 %v332, %v331
    %v451 = vpack.c.b16 %v334, %v333
    %v452 = vpack.c.b16 %v336, %v335
    %v453 = vpack.c.b16 %v338, %v337
    %v454 = vpack.c.b16 %v340, %v339
    %v455 = vpack.c.b16 %v342, %v341
    %v456 = vpack.c.b16 %v344, %v343
    %v457 = vpack.c.b16 %v346, %v345
    %v458 = vpack.c.b16 %v348, %v347
    %v459 = vpack.c.b16 %v350, %v349
    %v460 = vpack.c.b16 %v352, %v351
    %v461 = vpack.c.b16 %v354, %v353
    %v462 = vpack.c.b16 %v356, %v355
    %v463 = vpack.c.b16 %v358, %v357
    %v464 = vpack.c.b16 %v360, %v359
    %v465 = vpack.c.b16 %v362, %v361
    %v466 = vpack.c.b16 %v364, %v363
    %v467 = vpack.c.b16 %v366, %v365
    %v468 = vpack.c.b16 %v368, %v367
    %v469 = vpack.c.b16 %v370, %v369
    %v470 = vpack.c.b16 %v372, %v371
    %v471 = vpack.c.b16 %v374, %v373
    %v472 = vpack.c.b16 %v376, %v375
    %v473 = vpack.c.b16 %v378, %v377
    %v474 = vpack.c.b16 %v380, %v379
    %v475 = vpack.c.b16 %v382, %v381
    %v476 = vpack.c.b16 %v384, %v383
    %v477 = vpack.c.b16 %v386, %v385
    %v478 = vpack.c.b16 %v388, %v387
    %v479 = vpack.c.b16 %v390, %v389
    %v480 = vpack.c.b16 %v392, %v391
    %v481 = vpack.c.b16 %v394, %v393
    %v482 = vpack.c.b16 %v396, %v395
    %v483 = vpack.c.b16 %v398, %v397
    %v484 = vpack.c.b16 %v400, %v399
    %v485 = vpack.c.b16 %v402, %v401
    %v486 = vpack.c.b16 %v404, %v403
    %v487 = vpack.c.b16 %v406, %v405
    %v488 = vpack.c.b16 %v408, %v407
    %v489 = vpack.c.b16 %v410, %v409
    %v490 = vpack.c.b16 %v412, %v411
    %v491 = vpack.c.b16 %v414, %v413
    %v492 = vpack.c.b16 %v416, %v415
    %v493 = vpack.c.b16 %v418, %v417
    %v494 = vpack.c.b16 %v420, %v419
    %v495 = vpack.c.b16 %v422, %v421
    %v496 = vpack.c.b16 %v424, %v423
    %v497 = vpack.c.b16 %v426, %v425
    %v498 = vpack.c.b16 %v428, %v427
    %v499 = vpack.c.b16 %v430, %v429
    %v500 = vpack.c.b16 %v432, %v431
    %v501 = vpack.c.b16 %v434, %v433
    %v502 = vpack.c.b16 %v436, %v435
    %v503 = vpack.c.b16 %v438, %v437
    %v504 = vpack.c.b16 %v440, %v439
    %569 = vmatpush.bf16.msra.mxu0 %v448
    %570 = vmatpush.bf16.msra.mxu0 %v447
    %571 = vmatpush.bf16.msra.mxu0 %v446
    %572 = vmatpush.bf16.msra.mxu0 %v445
    %573 = vmatpush.bf16.msra.mxu0 %v444
    %574 = vmatpush.bf16.msra.mxu0 %v443
    %575 = vmatpush.bf16.msra.mxu0 %v442
    %576 = vmatpush.bf16.msra.mxu0 %v441
    %577 = vmatmul.bf16.gmra.mxu0 %v169
    %v578 = vpop.f32.mrf.mxu0
    %v579 = vadd.f32 %v165, %v578
    %v580 = vpop.f32.mrf.mxu0
    %581 = vdwg.mxu0
    %582 = vmatpush.bf16.msra.mxu0 %v456
    %583 = vmatpush.bf16.msra.mxu0 %v455
    %584 = vmatpush.bf16.msra.mxu0 %v454
    %585 = vmatpush.bf16.msra.mxu0 %v453
    %586 = vmatpush.bf16.msra.mxu0 %v452
    %587 = vmatpush.bf16.msra.mxu0 %v451
    %588 = vmatpush.bf16.msra.mxu0 %v450
    %589 = vmatpush.bf16.msra.mxu0 %v449
    %590 = vmatmul.bf16.gmra.mxu0 %v170
    %v591 = vpop.f32.mrf.mxu0
    %v592 = vadd.f32 %v579, %v591
    %v593 = vpop.f32.mrf.mxu0
    %594 = vdwg.mxu0
    %595 = vmatpush.bf16.msra.mxu0 %v464
    %596 = vmatpush.bf16.msra.mxu0 %v463
    %597 = vmatpush.bf16.msra.mxu0 %v462
    %598 = vmatpush.bf16.msra.mxu0 %v461
    %599 = vmatpush.bf16.msra.mxu0 %v460
    %600 = vmatpush.bf16.msra.mxu0 %v459
    %601 = vmatpush.bf16.msra.mxu0 %v458
    %602 = vmatpush.bf16.msra.mxu0 %v457
    %603 = vmatmul.bf16.gmra.mxu0 %v171
    %v604 = vpop.f32.mrf.mxu0
    %v605 = vadd.f32 %v592, %v604
    %v606 = vpop.f32.mrf.mxu0
    %607 = vdwg.mxu0
    %608 = vmatpush.bf16.msra.mxu0 %v472
    %609 = vmatpush.bf16.msra.mxu0 %v471
    %610 = vmatpush.bf16.msra.mxu0 %v470
    %611 = vmatpush.bf16.msra.mxu0 %v469
    %612 = vmatpush.bf16.msra.mxu0 %v468
    %613 = vmatpush.bf16.msra.mxu0 %v467
    %614 = vmatpush.bf16.msra.mxu0 %v466
    %615 = vmatpush.bf16.msra.mxu0 %v465
    %616 = vmatmul.bf16.gmra.mxu0 %v172
    %v617 = vpop.f32.mrf.mxu0
    %v618 = vadd.f32 %v605, %v617
    %v619 = vpop.f32.mrf.mxu0
    %620 = vdwg.mxu0
    %621 = vmatpush.bf16.msra.mxu0 %v480
    %622 = vmatpush.bf16.msra.mxu0 %v479
    %623 = vmatpush.bf16.msra.mxu0 %v478
    %624 = vmatpush.bf16.msra.mxu0 %v477
    %625 = vmatpush.bf16.msra.mxu0 %v476
    %626 = vmatpush.bf16.msra.mxu0 %v475
    %627 = vmatpush.bf16.msra.mxu0 %v474
    %628 = vmatpush.bf16.msra.mxu0 %v473
    %629 = vmatmul.bf16.gmra.mxu0 %v173
    %v630 = vpop.f32.mrf.mxu0
    %v631 = vadd.f32 %v618, %v630
    %v632 = vpop.f32.mrf.mxu0
    %633 = vdwg.mxu0
    %634 = vmatpush.bf16.msra.mxu0 %v488
    %635 = vmatpush.bf16.msra.mxu0 %v487
    %636 = vmatpush.bf16.msra.mxu0 %v486
    %637 = vmatpush.bf16.msra.mxu0 %v485
    %638 = vmatpush.bf16.msra.mxu0 %v484
    %639 = vmatpush.bf16.msra.mxu0 %v483
    %640 = vmatpush.bf16.msra.mxu0 %v482
    %641 = vmatpush.bf16.msra.mxu0 %v481
    %642 = vmatmul.bf16.gmra.mxu0 %v174
    %v643 = vpop.f32.mrf.mxu0
    %v644 = vadd.f32 %v631, %v643
    %v645 = vpop.f32.mrf.mxu0
    %646 = vdwg.mxu0
    %647 = vmatpush.bf16.msra.mxu0 %v496
    %648 = vmatpush.bf16.msra.mxu0 %v495
    %649 = vmatpush.bf16.msra.mxu0 %v494
    %650 = vmatpush.bf16.msra.mxu0 %v493
    %651 = vmatpush.bf16.msra.mxu0 %v492
    %652 = vmatpush.bf16.msra.mxu0 %v491
    %653 = vmatpush.bf16.msra.mxu0 %v490
    %654 = vmatpush.bf16.msra.mxu0 %v489
    %655 = vmatmul.bf16.gmra.mxu0 %v175
    %v656 = vpop.f32.mrf.mxu0
    %v657 = vadd.f32 %v644, %v656
    %v658 = vpop.f32.mrf.mxu0
    %659 = vdwg.mxu0
    %660 = vmatpush.bf16.msra.mxu0 %v504
    %661 = vmatpush.bf16.msra.mxu0 %v503
    %662 = vmatpush.bf16.msra.mxu0 %v502
    %663 = vmatpush.bf16.msra.mxu0 %v501
    %664 = vmatpush.bf16.msra.mxu0 %v500
    %665 = vmatpush.bf16.msra.mxu0 %v499
    %666 = vmatpush.bf16.msra.mxu0 %v498
    %667 = vmatpush.bf16.msra.mxu0 %v497
    %668 = vmatmul.bf16.gmra.mxu0 %v176
    %v669 = vpop.f32.mrf.mxu0
    %v670 = vadd.f32 %v657, %v669
    %v671 = vpop.f32.mrf.mxu0
    %672 = vdwg.mxu0
    %vm673 = vcmask 254976
    %v674 = vsel %vm673, %v670, inf
    %675 = vmin.xlane.f32.xlu0 %v674
    %v676 = vpop.xlane.xlu0 %675
    %v677 = vrot.slane %v676, 4
    %v678 = vmin.f32 %v676, %v677
    %v679 = vrot.slane %v678, 2
    %v680 = vmin.f32 %v678, %v679
    %v681 = vrot.slane %v680, 1
    %v682 = vmin.f32 %v680, %v681
    %s683 = vtos %v682
    %v684 = vsel %vm673, %v670, -inf
    %685 = vmax.xlane.f32.xlu0 %v684
    %v686 = vpop.xlane.xlu0 %685
    %v687 = vrot.slane %v686, 4
    %v688 = vmax.f32 %v686, %v687
    %v689 = vrot.slane %v688, 2
    %v690 = vmax.f32 %v688, %v689
    %v691 = vrot.slane %v690, 1
    %v692 = vmax.f32 %v690, %v691
    %s693 = vtos %v692
    %s694 = ssub.f32 %s693, %s683
    %p695 = scmp.eq.f32.partialorder %s694, 0.0
    %s696 = scalar_select %p695, 1.0, %s694
    %v697 = vstv %s696
    %v698 = vrcp.pop %v697
    %v699 = vmul.f32 %v697, %v698
    %v700 = vsub.f32 1.0, %v699
    %v701 = vmul.f32 %v698, %v700
    %v702 = vadd.f32 %v698, %v701
    %vm703 = vweird.f32 %v697
    %vm704 = vweird.f32 %v698
    %vm705 = vmor %vm703, %vm704
    %v706 = vsel %vm705, %v698, %v702
    %v707 = vand.u32 2147483647, %v697
    %vm708 = vcmp.eq.f32.partialorder %v707, 8.507059e+37
    %v709 = vand.u32 %v697, 2147483648
    %v710 = vor.u32 1.1754944e-38, %v709
    %v711 = vsel %vm708, %v710, %v706
    %s712 = vtos %v711
    %s713 = smul.f32 255.0, %s712
    %v714 = vrcp.pop 255.0
    %v715 = vmul.f32 255.0, %v714
    %v716 = vsub.f32 1.0, %v715
    %v717 = vmul.f32 %v714, %v716
    %v718 = vadd.f32 %v714, %v717
    %vm719 = vweird.f32 %v714
    %v720 = vsel %vm719, %v714, %v718
    %s721 = vtos %v720
    %s722 = smul.f32 %s696, %s721
    %v723 = vstv %s683
    %v724 = vsub.f32 %v670, %v723
    %v725 = vstv %s713
    %v726 = vmul.f32 %v724, %v725
    %v727 = vround.ne.pseudo %v726
    %v728 = vstv %s722
    %v729 = vmul.f32 %v727, %v728
    %v730 = vadd.f32 %v729, %v723
    %s731 = scalar_select %p695, 1, 0
    %v732 = vstv %s731
    %vm733 = vcmp.eq.s32.totalorder %v732, 1
    %v734 = vsel %vm733, %v670, %v730
    %v735 = vmax.f32 %v734, 0.0
    %s736 = smax.f32 %s683, 0.0
    %s737 = smax.f32 %s693, 0.0
    %s738 = ssub.f32 %s737, %s736
    %p739 = scmp.eq.f32.partialorder %s738, 0.0
    %s740 = scalar_select %p739, 1.0, %s738
    %v741 = vstv %s740
    %v742 = vrcp.pop %v741
    %v743 = vmul.f32 %v741, %v742
    %v744 = vsub.f32 1.0, %v743
    %v745 = vmul.f32 %v742, %v744
    %v746 = vadd.f32 %v742, %v745
    %vm747 = vweird.f32 %v741
    %vm748 = vweird.f32 %v742
    %vm749 = vmor %vm747, %vm748
    %v750 = vsel %vm749, %v742, %v746
    %v751 = vand.u32 2147483647, %v741
    %vm752 = vcmp.eq.f32.partialorder %v751, 8.507059e+37
    %v753 = vand.u32 %v741, 2147483648
    %v754 = vor.u32 1.1754944e-38, %v753
    %v755 = vsel %vm752, %v754, %v750
    %s756 = vtos %v755
    %s757 = smul.f32 255.0, %s756
    %v758 = vrcp.pop 255.0
    %v759 = vmul.f32 255.0, %v758
    %v760 = vsub.f32 1.0, %v759
    %v761 = vmul.f32 %v758, %v760
    %v762 = vadd.f32 %v758, %v761
    %vm763 = vweird.f32 %v758
    %v764 = vsel %vm763, %v758, %v762
    %s765 = vtos %v764
    %s766 = smul.f32 %s740, %s765
    %v767 = vstv %s736
    %v768 = vsub.f32 %v735, %v767
    %v769 = vstv %s757
    %v770 = vmul.f32 %v768, %v769
    %v771 = vround.ne.pseudo %v770
    %v772 = vstv %s766
    %v773 = vmul.f32 %v771, %v772
    %v774 = vadd.f32 %v773, %v767
    %s775 = scalar_select %p739, 1, 0
    %v776 = vstv %s775
    %vm777 = vcmp.eq.s32.totalorder %v776, 1
    %v778 = vsel %vm777, %v735, %v774
    %v779 = vpack.c.bf16 %v778, %v778
    %v780 = vld [vmem:[%s3] sm:$0xf]
    %v781 = vld [vmem:[%s3 + $0x4] sm:$0xf]
    %v782 = vld [vmem:[%s3 + $0x8] sm:$0xf]
    %v783 = vld [vmem:[%s3 + $0xc] sm:$0xf]
    %v784 = vld [vmem:[%s4] sm:$0x1]
    %v786 = vperm.slane %v784, 0
    %v792 = vunpack.c.l.b16 %v780
    %v793 = vunpack.c.l.b16 %v781
    %v794 = vunpack.c.l.b16 %v782
    %v795 = vunpack.c.l.b16 %v783
    %v796 = vpack.c.b16 %v793, %v792
    %v797 = vpack.c.b16 %v795, %v794
    %vm800 = vcmask 261120
    %v802 = vsel %vm800, %v779, 0
    %804 = vmatpush.bf16.msra.mxu0 0
    %805 = vmatpush.bf16.msra.mxu0 0
    %806 = vmatpush.bf16.msra.mxu0 0
    %807 = vmatpush.bf16.msra.mxu0 0
    %808 = vmatpush.bf16.msra.mxu0 0
    %809 = vmatpush.bf16.msra.mxu0 0
    %810 = vmatpush.bf16.msra.mxu0 %v797
    %811 = vmatpush.bf16.msra.mxu0 %v796
    %812 = vmatmul.bf16.gmra.mxu0 %v802
    %v813 = vpop.f32.mrf.mxu0
    %v814 = vadd.f32 %v786, %v813
    %v815 = vpop.f32.mrf.mxu0
    %816 = vdwg.mxu0
    %v817 = vsel %vm673, %v814, inf
    %818 = vmin.xlane.f32.xlu0 %v817
    %v819 = vpop.xlane.xlu0 %818
    %v820 = vrot.slane %v819, 4
    %v821 = vmin.f32 %v819, %v820
    %v822 = vrot.slane %v821, 2
    %v823 = vmin.f32 %v821, %v822
    %v824 = vrot.slane %v823, 1
    %v825 = vmin.f32 %v823, %v824
    %s826 = vtos %v825
    %v827 = vsel %vm673, %v814, -inf
    %828 = vmax.xlane.f32.xlu0 %v827
    %v829 = vpop.xlane.xlu0 %828
    %v830 = vrot.slane %v829, 4
    %v831 = vmax.f32 %v829, %v830
    %v832 = vrot.slane %v831, 2
    %v833 = vmax.f32 %v831, %v832
    %v834 = vrot.slane %v833, 1
    %v835 = vmax.f32 %v833, %v834
    %s836 = vtos %v835
    %s837 = ssub.f32 %s836, %s826
    %p838 = scmp.eq.f32.partialorder %s837, 0.0
    %s839 = scalar_select %p838, 1.0, %s837
    %v840 = vstv %s839
    %v841 = vrcp.pop %v840
    %v842 = vmul.f32 %v840, %v841
    %v843 = vsub.f32 1.0, %v842
    %v844 = vmul.f32 %v841, %v843
    %v845 = vadd.f32 %v841, %v844
    %vm846 = vweird.f32 %v840
    %vm847 = vweird.f32 %v841
    %vm848 = vmor %vm846, %vm847
    %v849 = vsel %vm848, %v841, %v845
    %v850 = vand.u32 2147483647, %v840
    %vm851 = vcmp.eq.f32.partialorder %v850, 8.507059e+37
    %v852 = vand.u32 %v840, 2147483648
    %v853 = vor.u32 1.1754944e-38, %v852
    %v854 = vsel %vm851, %v853, %v849
    %s855 = vtos %v854
    %s856 = smul.f32 255.0, %s855
    %v857 = vrcp.pop 255.0
    %v858 = vmul.f32 255.0, %v857
    %v859 = vsub.f32 1.0, %v858
    %v860 = vmul.f32 %v857, %v859
    %v861 = vadd.f32 %v857, %v860
    %vm862 = vweird.f32 %v857
    %v863 = vsel %vm862, %v857, %v861
    %s864 = vtos %v863
    %s865 = smul.f32 %s839, %s864
    %v866 = vstv %s826
    %v867 = vsub.f32 %v814, %v866
    %v868 = vstv %s856
    %v869 = vmul.f32 %v867, %v868
    %v870 = vround.ne.pseudo %v869
    %v871 = vstv %s865
    %v872 = vmul.f32 %v870, %v871
    %v873 = vadd.f32 %v872, %v866
    %s874 = scalar_select %p838, 1, 0
    %v875 = vstv %s874
    %vm876 = vcmp.eq.s32.totalorder %v875, 1
    %v877 = vsel %vm876, %v814, %v873
    %v878 = vmax.f32 %v877, 0.0
    %s879 = smax.f32 %s826, 0.0
    %s880 = smax.f32 %s836, 0.0
    %s881 = ssub.f32 %s880, %s879
    %p882 = scmp.eq.f32.partialorder %s881, 0.0
    %s883 = scalar_select %p882, 1.0, %s881
    %v884 = vstv %s883
    %v885 = vrcp.pop %v884
    %v886 = vmul.f32 %v884, %v885
    %v887 = vsub.f32 1.0, %v886
    %v888 = vmul.f32 %v885, %v887
    %v889 = vadd.f32 %v885, %v888
    %vm890 = vweird.f32 %v884
    %vm891 = vweird.f32 %v885
    %vm892 = vmor %vm890, %vm891
    %v893 = vsel %vm892, %v885, %v889
    %v894 = vand.u32 2147483647, %v884
    %vm895 = vcmp.eq.f32.partialorder %v894, 8.507059e+37
    %v896 = vand.u32 %v884, 2147483648
    %v897 = vor.u32 1.1754944e-38, %v896
    %v898 = vsel %vm895, %v897, %v893
    %s899 = vtos %v898
    %s900 = smul.f32 255.0, %s899
    %v901 = vrcp.pop 255.0
    %v902 = vmul.f32 255.0, %v901
    %v903 = vsub.f32 1.0, %v902
    %v904 = vmul.f32 %v901, %v903
    %v905 = vadd.f32 %v901, %v904
    %vm906 = vweird.f32 %v901
    %v907 = vsel %vm906, %v901, %v905
    %s908 = vtos %v907
    %s909 = smul.f32 %s883, %s908
    %v910 = vstv %s879
    %v911 = vsub.f32 %v878, %v910
    %v912 = vstv %s900
    %v913 = vmul.f32 %v911, %v912
    %v914 = vround.ne.pseudo %v913
    %v915 = vstv %s909
    %v916 = vmul.f32 %v914, %v915
    %v917 = vadd.f32 %v916, %v910
    %s918 = scalar_select %p882, 1, 0
    %v919 = vstv %s918
    %vm920 = vcmp.eq.s32.totalorder %v919, 1
    %v921 = vsel %vm920, %v878, %v917
    %v922 = vpack.c.bf16 %v921, %v921
    %v923 = vld [vmem:[%s5] sm:$0xf]
    %v924 = vld [vmem:[%s5 + $0x4] sm:$0xf]
    %v925 = vld [vmem:[%s5 + $0x8] sm:$0xf]
    %v926 = vld [vmem:[%s5 + $0xc] sm:$0xf]
    %v927 = vld [vmem:[%s6] sm:$0x1]
    %v929 = vperm.slane %v927, 0
    %v935 = vunpack.c.l.b16 %v923
    %v936 = vunpack.c.l.b16 %v924
    %v937 = vunpack.c.l.b16 %v925
    %v938 = vunpack.c.l.b16 %v926
    %v939 = vpack.c.b16 %v936, %v935
    %v940 = vpack.c.b16 %v938, %v937
    %v944 = vsel %vm800, %v922, 0
    %946 = vmatpush.bf16.msra.mxu0 0
    %947 = vmatpush.bf16.msra.mxu0 0
    %948 = vmatpush.bf16.msra.mxu0 0
    %949 = vmatpush.bf16.msra.mxu0 0
    %950 = vmatpush.bf16.msra.mxu0 0
    %951 = vmatpush.bf16.msra.mxu0 0
    %952 = vmatpush.bf16.msra.mxu0 %v940
    %953 = vmatpush.bf16.msra.mxu0 %v939
    %954 = vmatmul.bf16.gmra.mxu0 %v944
    %v955 = vpop.f32.mrf.mxu0
    %v956 = vadd.f32 %v929, %v955
    %v957 = vpop.f32.mrf.mxu0
    %958 = vdwg.mxu0
    %v959 = vsel %vm673, %v956, inf
    %960 = vmin.xlane.f32.xlu0 %v959
    %v961 = vpop.xlane.xlu0 %960
    %v962 = vrot.slane %v961, 4
    %v963 = vmin.f32 %v961, %v962
    %v964 = vrot.slane %v963, 2
    %v965 = vmin.f32 %v963, %v964
    %v966 = vrot.slane %v965, 1
    %v967 = vmin.f32 %v965, %v966
    %s968 = vtos %v967
    %v969 = vsel %vm673, %v956, -inf
    %970 = vmax.xlane.f32.xlu0 %v969
    %v971 = vpop.xlane.xlu0 %970
    %v972 = vrot.slane %v971, 4
    %v973 = vmax.f32 %v971, %v972
    %v974 = vrot.slane %v973, 2
    %v975 = vmax.f32 %v973, %v974
    %v976 = vrot.slane %v975, 1
    %v977 = vmax.f32 %v975, %v976
    %s978 = vtos %v977
    %s979 = ssub.f32 %s978, %s968
    %p980 = scmp.eq.f32.partialorder %s979, 0.0
    %s981 = scalar_select %p980, 1.0, %s979
    %v982 = vstv %s981
    %v983 = vrcp.pop %v982
    %v984 = vmul.f32 %v982, %v983
    %v985 = vsub.f32 1.0, %v984
    %v986 = vmul.f32 %v983, %v985
    %v987 = vadd.f32 %v983, %v986
    %vm988 = vweird.f32 %v982
    %vm989 = vweird.f32 %v983
    %vm990 = vmor %vm988, %vm989
    %v991 = vsel %vm990, %v983, %v987
    %v992 = vand.u32 2147483647, %v982
    %vm993 = vcmp.eq.f32.partialorder %v992, 8.507059e+37
    %v994 = vand.u32 %v982, 2147483648
    %v995 = vor.u32 1.1754944e-38, %v994
    %v996 = vsel %vm993, %v995, %v991
    %s997 = vtos %v996
    %s998 = smul.f32 255.0, %s997
    %v999 = vrcp.pop 255.0
    %v1000 = vmul.f32 255.0, %v999
    %v1001 = vsub.f32 1.0, %v1000
    %v1002 = vmul.f32 %v999, %v1001
    %v1003 = vadd.f32 %v999, %v1002
    %vm1004 = vweird.f32 %v999
    %v1005 = vsel %vm1004, %v999, %v1003
    %s1006 = vtos %v1005
    %s1007 = smul.f32 %s981, %s1006
    %v1008 = vstv %s968
    %v1009 = vsub.f32 %v956, %v1008
    %v1010 = vstv %s998
    %v1011 = vmul.f32 %v1009, %v1010
    %v1012 = vround.ne.pseudo %v1011
    %v1013 = vstv %s1007
    %v1014 = vmul.f32 %v1012, %v1013
    %v1015 = vadd.f32 %v1014, %v1008
    %s1016 = scalar_select %p980, 1, 0
    %v1017 = vstv %s1016
    %vm1018 = vcmp.eq.s32.totalorder %v1017, 1
    %v1019 = vsel %vm1018, %v956, %v1015
    %v1020 = vmax.f32 %v1019, 0.0
    %s1021 = smax.f32 %s968, 0.0
    %s1022 = smax.f32 %s978, 0.0
    %s1023 = ssub.f32 %s1022, %s1021
    %p1024 = scmp.eq.f32.partialorder %s1023, 0.0
    %s1025 = scalar_select %p1024, 1.0, %s1023
    %v1026 = vstv %s1025
    %v1027 = vrcp.pop %v1026
    %v1028 = vmul.f32 %v1026, %v1027
    %v1029 = vsub.f32 1.0, %v1028
    %v1030 = vmul.f32 %v1027, %v1029
    %v1031 = vadd.f32 %v1027, %v1030
    %vm1032 = vweird.f32 %v1026
    %vm1033 = vweird.f32 %v1027
    %vm1034 = vmor %vm1032, %vm1033
    %v1035 = vsel %vm1034, %v1027, %v1031
    %v1036 = vand.u32 2147483647, %v1026
    %vm1037 = vcmp.eq.f32.partialorder %v1036, 8.507059e+37
    %v1038 = vand.u32 %v1026, 2147483648
    %v1039 = vor.u32 1.1754944e-38, %v1038
    %v1040 = vsel %vm1037, %v1039, %v1035
    %s1041 = vtos %v1040
    %s1042 = smul.f32 255.0, %s1041
    %v1043 = vrcp.pop 255.0
    %v1044 = vmul.f32 255.0, %v1043
    %v1045 = vsub.f32 1.0, %v1044
    %v1046 = vmul.f32 %v1043, %v1045
    %v1047 = vadd.f32 %v1043, %v1046
    %vm1048 = vweird.f32 %v1043
    %v1049 = vsel %vm1048, %v1043, %v1047
    %s1050 = vtos %v1049
    %s1051 = smul.f32 %s1025, %s1050
    %v1052 = vstv %s1021
    %v1053 = vsub.f32 %v1020, %v1052
    %v1054 = vstv %s1042
    %v1055 = vmul.f32 %v1053, %v1054
    %v1056 = vround.ne.pseudo %v1055
    %v1057 = vstv %s1051
    %v1058 = vmul.f32 %v1056, %v1057
    %v1059 = vadd.f32 %v1058, %v1052
    %s1060 = scalar_select %p1024, 1, 0
    %v1061 = vstv %s1060
    %vm1062 = vcmp.eq.s32.totalorder %v1061, 1
    %v1063 = vsel %vm1062, %v1020, %v1059
    %v1064 = vpack.c.bf16 %v1063, %v1063
    %v1065 = vld [vmem:[%s7] sm:$0xf]
    %v1066 = vld [vmem:[%s7 + $0x4] sm:$0xf]
    %v1067 = vld [vmem:[%s7 + $0x8] sm:$0xf]
    %v1068 = vld [vmem:[%s7 + $0xc] sm:$0xf]
    %v1069 = vld [vmem:[%s8] sm:$0x1]
    %v1071 = vperm.slane %v1069, 0
    %v1077 = vunpack.c.l.b16 %v1065
    %v1078 = vunpack.c.l.b16 %v1066
    %v1079 = vunpack.c.l.b16 %v1067
    %v1080 = vunpack.c.l.b16 %v1068
    %v1081 = vpack.c.b16 %v1078, %v1077
    %v1082 = vpack.c.b16 %v1080, %v1079
    %v1086 = vsel %vm800, %v1064, 0
    %1088 = vmatpush.bf16.msra.mxu0 0
    %1089 = vmatpush.bf16.msra.mxu0 0
    %1090 = vmatpush.bf16.msra.mxu0 0
    %1091 = vmatpush.bf16.msra.mxu0 0
    %1092 = vmatpush.bf16.msra.mxu0 0
    %1093 = vmatpush.bf16.msra.mxu0 0
    %1094 = vmatpush.bf16.msra.mxu0 %v1082
    %1095 = vmatpush.bf16.msra.mxu0 %v1081
    %1096 = vmatmul.bf16.gmra.mxu0 %v1086
    %v1097 = vpop.f32.mrf.mxu0
    %v1098 = vadd.f32 %v1071, %v1097
    %v1099 = vpop.f32.mrf.mxu0
    %1100 = vdwg.mxu0
    %v1101 = vlaneseq
    %v1102 = vand.u32 %v1101, 127
    %vm1103 = vcmp.lt.s32.totalorder %v1102, 10
    %v1104 = vsel %vm1103, %v1098, inf
    %vm1105 = vcmask 1041408
    %v1106 = vsel %vm1105, %v1104, inf
    %1107 = vmin.xlane.f32.xlu0 %v1106
    %v1108 = vpop.xlane.xlu0 %1107
    %v1109 = vrot.slane %v1108, 4
    %v1110 = vmin.f32 %v1108, %v1109
    %v1111 = vrot.slane %v1110, 2
    %v1112 = vmin.f32 %v1110, %v1111
    %v1113 = vrot.slane %v1112, 1
    %v1114 = vmin.f32 %v1112, %v1113
    %s1115 = vtos %v1114
    %v1116 = vsel %vm1103, %v1098, -inf
    %v1117 = vsel %vm1105, %v1116, -inf
    %1118 = vmax.xlane.f32.xlu0 %v1117
    %v1119 = vpop.xlane.xlu0 %1118
    %v1120 = vrot.slane %v1119, 4
    %v1121 = vmax.f32 %v1119, %v1120
    %v1122 = vrot.slane %v1121, 2
    %v1123 = vmax.f32 %v1121, %v1122
    %v1124 = vrot.slane %v1123, 1
    %v1125 = vmax.f32 %v1123, %v1124
    %s1126 = vtos %v1125
    %s1127 = ssub.f32 %s1126, %s1115
    %p1128 = scmp.eq.f32.partialorder %s1127, 0.0
    %s1129 = scalar_select %p1128, 1.0, %s1127
    %v1130 = vstv %s1129
    %v1131 = vrcp.pop %v1130
    %v1132 = vmul.f32 %v1130, %v1131
    %v1133 = vsub.f32 1.0, %v1132
    %v1134 = vmul.f32 %v1131, %v1133
    %v1135 = vadd.f32 %v1131, %v1134
    %vm1136 = vweird.f32 %v1130
    %vm1137 = vweird.f32 %v1131
    %vm1138 = vmor %vm1136, %vm1137
    %v1139 = vsel %vm1138, %v1131, %v1135
    %v1140 = vand.u32 2147483647, %v1130
    %vm1141 = vcmp.eq.f32.partialorder %v1140, 8.507059e+37
    %v1142 = vand.u32 %v1130, 2147483648
    %v1143 = vor.u32 1.1754944e-38, %v1142
    %v1144 = vsel %vm1141, %v1143, %v1139
    %s1145 = vtos %v1144
    %s1146 = smul.f32 255.0, %s1145
    %v1147 = vrcp.pop 255.0
    %v1148 = vmul.f32 255.0, %v1147
    %v1149 = vsub.f32 1.0, %v1148
    %v1150 = vmul.f32 %v1147, %v1149
    %v1151 = vadd.f32 %v1147, %v1150
    %vm1152 = vweird.f32 %v1147
    %v1153 = vsel %vm1152, %v1147, %v1151
    %s1154 = vtos %v1153
    %s1155 = smul.f32 %s1129, %s1154
    %v1156 = vstv %s1115
    %v1157 = vsub.f32 %v1098, %v1156
    %v1158 = vstv %s1146
    %v1159 = vmul.f32 %v1157, %v1158
    %v1160 = vround.ne.pseudo %v1159
    %v1161 = vstv %s1155
    %v1162 = vmul.f32 %v1160, %v1161
    %v1163 = vadd.f32 %v1162, %v1156
    %s1164 = scalar_select %p1128, 1, 0
    %v1165 = vstv %s1164
    %vm1166 = vcmp.eq.s32.totalorder %v1165, 1
    %v1167 = vsel %vm1166, %v1098, %v1163
    %v1168 = vsel %vm1103, %v1167, -inf
    %v1169 = vsel %vm1105, %v1168, -inf
    %1170 = vmax.xlane.f32.xlu0 %v1169
    %v1171 = vpop.xlane.xlu0 %1170
    %v1172 = vsub.f32 %v1168, %v1171
    %v1173 = vmul.f32 %v1172, 1.442695
    %v1174 = vpow.pop %v1173
    %v1175 = vsel %vm1105, %v1174, 0.0
    %1176 = vadd.xlane.f32.xlu0 %v1175
    %v1177 = vpop.xlane.xlu0 %1176
    %v1178 = vlog2.pop %v1177
    %v1179 = vmul.f32 %v1178, 0.6931472
    %v1180 = vadd.f32 %v1179, %v1171
    %v1181 = vsub.f32 %v1167, %v1180
    %v1182 = vsel %vm1103, %v1181, inf
    %v1183 = vsel %vm1105, %v1182, inf
    %1184 = vmin.xlane.f32.xlu0 %v1183
    %v1185 = vpop.xlane.xlu0 %1184
    %v1186 = vrot.slane %v1185, 4
    %v1187 = vmin.f32 %v1185, %v1186
    %v1188 = vrot.slane %v1187, 2
    %v1189 = vmin.f32 %v1187, %v1188
    %v1190 = vrot.slane %v1189, 1
    %v1191 = vmin.f32 %v1189, %v1190
    %s1192 = vtos %v1191
    %v1193 = vsel %vm1103, %v1181, -inf
    %v1194 = vsel %vm1105, %v1193, -inf
    %1195 = vmax.xlane.f32.xlu0 %v1194
    %v1196 = vpop.xlane.xlu0 %1195
    %v1197 = vrot.slane %v1196, 4
    %v1198 = vmax.f32 %v1196, %v1197
    %v1199 = vrot.slane %v1198, 2
    %v1200 = vmax.f32 %v1198, %v1199
    %v1201 = vrot.slane %v1200, 1
    %v1202 = vmax.f32 %v1200, %v1201
    %s1203 = vtos %v1202
    %s1204 = ssub.f32 %s1203, %s1192
    %p1205 = scmp.eq.f32.partialorder %s1204, 0.0
    %s1206 = scalar_select %p1205, 1.0, %s1204
    %v1207 = vstv %s1206
    %v1208 = vrcp.pop %v1207
    %v1209 = vmul.f32 %v1207, %v1208
    %v1210 = vsub.f32 1.0, %v1209
    %v1211 = vmul.f32 %v1208, %v1210
    %v1212 = vadd.f32 %v1208, %v1211
    %vm1213 = vweird.f32 %v1207
    %vm1214 = vweird.f32 %v1208
    %vm1215 = vmor %vm1213, %vm1214
    %v1216 = vsel %vm1215, %v1208, %v1212
    %v1217 = vand.u32 2147483647, %v1207
    %vm1218 = vcmp.eq.f32.partialorder %v1217, 8.507059e+37
    %v1219 = vand.u32 %v1207, 2147483648
    %v1220 = vor.u32 1.1754944e-38, %v1219
    %v1221 = vsel %vm1218, %v1220, %v1216
    %s1222 = vtos %v1221
    %s1223 = smul.f32 255.0, %s1222
    %v1224 = vrcp.pop 255.0
    %v1225 = vmul.f32 255.0, %v1224
    %v1226 = vsub.f32 1.0, %v1225
    %v1227 = vmul.f32 %v1224, %v1226
    %v1228 = vadd.f32 %v1224, %v1227
    %vm1229 = vweird.f32 %v1224
    %v1230 = vsel %vm1229, %v1224, %v1228
    %s1231 = vtos %v1230
    %s1232 = smul.f32 %s1206, %s1231
    %v1233 = vstv %s1192
    %v1234 = vsub.f32 %v1181, %v1233
    %v1235 = vstv %s1223
    %v1236 = vmul.f32 %v1234, %v1235
    %v1237 = vround.ne.pseudo %v1236
    %v1238 = vstv %s1232
    %v1239 = vmul.f32 %v1237, %v1238
    %v1240 = vadd.f32 %v1239, %v1233
    %s1241 = scalar_select %p1205, 1, 0
    %v1242 = vstv %s1241
    %vm1243 = vcmp.eq.s32.totalorder %v1242, 1
    %v1244 = vsel %vm1243, %v1181, %v1240
    %v1245 = vsel %vm1103, %v1244, 0.0
    %1246 = vst [vmem:[#allocation2] sm:$0x3] %v1245
    // Predicated region
    $region38: #{quantnet_forward.1} parent=1 // pred_check
      _
    $region39: #{quantnet_forward.1} parent=1 // pred_check_branch
      %1248 = sbr.rel (0) target = $region41
    $region40: #{quantnet_forward.1} parent=1 // pred_region
      %1250 = vsyncadd [#allocation3], 0
      %s1252 = sshll.u32 [#allocation2], 4
      %s1253 = int_to_ptr.vmem [resolvable:$true] %s1252
      %s1254 = sshll.u32 %s9, 4
      %s1255 = int_to_ptr.hbm [resolvable:$true] %s1254
      %1257 = dma.vmem_to_hbm [thread:$0]  %s1253, 32, %s1255, [#allocation3]
    $region41: #{quantnet_forward.1} parent=1 // pred_fallthru
      _
    // Predicated region
    $region42: #{quantnet_forward.1} parent=1 // pred_check
      _
    $region43: #{quantnet_forward.1} parent=1 // pred_check_branch
      %1259 = sbr.rel (0) target = $region45
    $region44: #{quantnet_forward.1} parent=1 // pred_region
      %1261 = dma.done [#allocation3], 32
    $region45: #{quantnet_forward.1} parent=1 // pred_fallthru
      _
    %1262 = vsyncpa [#allocation3], 1

</llo_original>
